<compile_context>
chip_gen: v7x
topology: tpu7x:2x2x1
jax: 0.10.0
libtpu: 0.0.40
codegen_flags: <defaults>
</compile_context>

<pallas_src>
import jax
import jax.numpy as jnp
from jax.experimental import pallas as pl
from jax.experimental.pallas import tpu as pltpu


def _norm_zero_one_kernel(scale_bias_ref, x_ref, o_ref):
    # scale_bias_ref: (2,) float32 in SMEM -> [scale, bias]
    scale = scale_bias_ref[0]
    bias = scale_bias_ref[1]
    x = x_ref[...].astype(jnp.float32)
    o_ref[...] = (x * scale + bias).astype(o_ref.dtype)


_MAX_COLS = 8192
_TARGET_BLOCK_BYTES = 8 * 1024 * 1024  # ~8 MiB/block (~32 MiB live w/ double-buffering)


def _pick_cols(n: int, sub: int):
    """Largest multiple-of-128 divisor of n (<= 8192), preferring rows >= sub."""
    fallback = None
    for w in range(_MAX_COLS, 127, -128):
        if n % w == 0:
            if fallback is None:
                fallback = w
            if n // w >= sub:
                return w
    return fallback  # None -> nothing divides, caller pads


def norm_zero_one(x: jax.Array, min_max: jax.Array) -> jax.Array:
    """Normalize x to [0, 1] using (min, max) = min_max. Matches NormZeroOne.forward."""
    orig_shape = x.shape
    in_dtype = x.dtype
    out_dtype = in_dtype if jnp.issubdtype(in_dtype, jnp.floating) else jnp.float32

    n = x.size
    if n == 0:
        return x.astype(out_dtype)

    in_itemsize = jnp.dtype(in_dtype).itemsize
    out_itemsize = jnp.dtype(out_dtype).itemsize
    # sublane multiple for the *input* tiling: 8 (f32), 16 (bf16), 32 (int8)
    sub = max(8, 32 // in_itemsize)

    # ---- lane-dense 2-D view -------------------------------------------------
    cols = _pick_cols(n, sub)
    if cols is None:
        cols = 1024  # pad path: element count not a multiple of 128 (rare)
    n_pad = pl.cdiv(n, cols) * cols

    x_flat = x.reshape(-1)
    if n_pad != n:
        x_flat = jnp.pad(x_flat, (0, n_pad - n))
    rows = n_pad // cols
    x2 = x_flat.reshape(rows, cols)

    # ---- byte-budgeted row tiling ---------------------------------------------
    tr_budget = _TARGET_BLOCK_BYTES // (cols * in_itemsize)
    tr = max(sub, (tr_budget // sub) * sub)
    if tr >= rows:
        # Whole tensor fits in one block: still split so (a) v7x's two cores both
        # get work and (b) each core keeps some DMA/compute overlap.
        if rows >= 4 * sub:
            steps = 4
        elif rows >= 2 * sub:
            steps = 2
        else:
            steps = 1
        if steps == 1:
            tr = rows  # full-extent block is always legal
        else:
            tr = ((pl.cdiv(rows, steps) + sub - 1) // sub) * sub

    grid = (pl.cdiv(rows, tr),)
    block_bytes = tr * cols * max(in_itemsize, out_itemsize)
    # Input and output blocks are each double-buffered -> ~4x block_bytes live.
    vmem_limit = int(min(100 * 1024 * 1024,
                         max(32 * 1024 * 1024, 4 * block_bytes + (4 << 20))))

    # scale/bias computed once (tiny XLA op); kernel is a pure FMA.
    mm = min_max.astype(jnp.float32)
    scale = 1.0 / (mm[1] - mm[0])
    bias = -mm[0] * scale
    scale_bias = jnp.stack([scale, bias])

    out2 = pl.pallas_call(
        _norm_zero_one_kernel,
        out_shape=jax.ShapeDtypeStruct((rows, cols), out_dtype),
        grid_spec=pltpu.PrefetchScalarGridSpec(
            num_scalar_prefetch=0,
            grid=grid,
            in_specs=[
                pl.BlockSpec(memory_space=pltpu.SMEM),        # scale_bias (2,) f32
                pl.BlockSpec((tr, cols), lambda i: (i, 0)),   # x tile
            ],
            out_specs=pl.BlockSpec((tr, cols), lambda i: (i, 0)),
        ),
        compiler_params=pltpu.CompilerParams(
            dimension_semantics=("parallel",),
            vmem_limit_bytes=vmem_limit,
        ),
        cost_estimate=pl.CostEstimate(
            flops=2 * n_pad,
            transcendentals=0,
            bytes_accessed=n_pad * (in_itemsize + out_itemsize) + 8,
        ),
    )(scale_bias, x2)

    out_flat = out2.reshape(-1)
    if n_pad != n:
        out_flat = out_flat[:n]
    return out_flat.reshape(orig_shape)


if __name__ == "__main__":
    key = jax.random.PRNGKey(0)
    k1, k2 = jax.random.split(key)
    min_max = jnp.array([-2.0, 7.0], dtype=jnp.float32)
    denom = min_max[1] - min_max[0]

    # Case 1: small NCHW f32 input (lane-aligned element count).
    x = jax.random.normal(k1, (2, 4, 16, 16), dtype=jnp.float32) * 5.0 + 1.0
    y = norm_zero_one(x, min_max)
    jax.block_until_ready(y)
    y_ref = (x - min_max[0]) / denom
    assert y.shape == x.shape and y.dtype == x.dtype
    assert jnp.allclose(y, y_ref, atol=1e-5, rtol=1e-5)

    # Case 2: element count not divisible by 128 (exercises the pad path).
    x2 = jax.random.normal(k2, (3, 5, 7, 11), dtype=jnp.float32) * 3.0
    y2 = norm_zero_one(x2, min_max)
    jax.block_until_ready(y2)
    y2_ref = (x2 - min_max[0]) / denom
    assert y2.shape == x2.shape and y2.dtype == x2.dtype
    assert jnp.allclose(y2, y2_ref, atol=1e-5, rtol=1e-5)

    # Case 3: bf16 stays bf16 end-to-end (half the HBM bytes moved).
    xb = x.astype(jnp.bfloat16)
    yb = norm_zero_one(xb, min_max)
    jax.block_until_ready(yb)
    yb_ref = ((xb.astype(jnp.float32) - min_max[0]) / denom).astype(jnp.bfloat16)
    assert yb.shape == xb.shape and yb.dtype == jnp.bfloat16
    assert jnp.allclose(yb.astype(jnp.float32), yb_ref.astype(jnp.float32),
                        atol=2e-2, rtol=2e-2)

    print("KERNEL_OK")
</pallas_src>

<mosaic_0001>
module attributes {stable_mosaic.version = 11 : i64} {
  func.func @_norm_zero_one_kernel(%arg0: i32, %arg1: memref<2xf32, #tpu.memory_space<smem>>, %arg2: memref<8x256xf32, #tpu.memory_space<vmem>>, %arg3: memref<8x256xf32, #tpu.memory_space<vmem>>) attributes {dimension_semantics = [#tpu.dimension_semantics<parallel>], iteration_bounds = array<i64: 1>, scalar_prefetch = 0 : i64, scratch_operands = 0 : i64, tpu.core_type = #tpu.core_type<tc>, window_params = [{transform_indices = @transform_0, window_bounds = array<i64: 2>}, {transform_indices = @transform_1, window_bounds = array<i64: 8, 256>}, {transform_indices = @transform_2, window_bounds = array<i64: 8, 256>}]} {
    %c0 = arith.constant 0 : index
    %0 = memref.load %arg1[%c0] : memref<2xf32, #tpu.memory_space<smem>>
    %c1 = arith.constant 1 : index
    %1 = memref.load %arg1[%c1] : memref<2xf32, #tpu.memory_space<smem>>
    %c0_0 = arith.constant 0 : index
    %c0_1 = arith.constant 0 : index
    %2 = vector.load %arg2[%c0_0, %c0_1] : memref<8x256xf32, #tpu.memory_space<vmem>>, vector<8x256xf32>
    %3 = vector.broadcast %0 : f32 to vector<8x256xf32>
    %4 = arith.mulf %2, %3 : vector<8x256xf32>
    %5 = vector.broadcast %1 : f32 to vector<8x256xf32>
    %6 = arith.addf %4, %5 : vector<8x256xf32>
    %c0_2 = arith.constant 0 : index
    %c0_3 = arith.constant 0 : index
    %7 = vector.load %arg3[%c0_2, %c0_3] : memref<8x256xf32, #tpu.memory_space<vmem>>, vector<8x256xf32>
    tpu.vector_store %arg3[%c0_2, %c0_3], %6 {strides = array<i32>} : memref<8x256xf32, #tpu.memory_space<vmem>>, vector<8x256xf32>,
    return
  }
  func.func @transform_0(%arg0: i32) -> i32 {
    %c0_i32 = arith.constant 0 : i32
    %c0_i32_0 = arith.constant 0 : i32
    return %c0_i32 : i32
  }
  func.func @transform_1(%arg0: i32) -> (i32, i32) {
    %c0_i32 = arith.constant 0 : i32
    %c0_i32_0 = arith.constant 0 : i32
    return %arg0, %c0_i32 : i32, i32
  }
  func.func @transform_2(%arg0: i32) -> (i32, i32) {
    %c0_i32 = arith.constant 0 : i32
    %c0_i32_0 = arith.constant 0 : i32
    return %arg0, %c0_i32 : i32, i32
  }
}

</mosaic_0001>

<llo_original>
// kernel: tpu_custom_call.1
$region0: #{tpu_custom_call.1}
  #allocation0 [shape = 'u32[]', space=smem, size = 0x4, offset = 0x4, fixed_abs, tag = 'smem constant byte address 0x4 - core index']
  #allocation1 [shape = 'u32[144,128]{1,0:T(1,128)}', space=vmem, size = 0x12000, scoped, tag = 'internal scratch']
  %s0 = inlined_call_operand.hbm [shape: f32[2], index: 0, kind: input, shape index: {}]
  %s1 = inlined_call_operand.hbm [shape: f32[8,256], index: 1, kind: input, shape index: {}]
  %s2 = inlined_call_operand.hbm [shape: f32[8,256], index: 2, kind: output, shape index: {}]
  %s3 = sld [smem:[#allocation0]]
  $region26: #{tpu_custom_call.1} parent=0
    _
  %s5 = ssub.s32 1, %s3
  %s6 = scalar_select 0, %s5, %s3
  $region1: #{tpu_custom_call.1} parent=0
    #allocation2 [shape = 'u8[512]{0}', space=smem, size = 0x200, scoped, tag = 'input window, operand 0, single buffered']
    #allocation3 [shape = 's32[1]{0}', space=sflag, size = 0x4, scoped, tag = 'scoped memory for tpu_custom_call.1']
    #allocation4 [shape = 's32[1]{0}', space=sflag, size = 0x4, scoped, tag = 'scoped memory for tpu_custom_call.1']
    #allocation5 [shape = 's32[1]{0}', space=sflag, size = 0x4, scoped, tag = 'scoped memory for tpu_custom_call.1']
    #allocation6 [shape = 'u8[8192]{0}', space=vmem, size = 0x2000, scoped, tag = 'input window, operand 1, single buffered']
    #allocation7 [shape = 'u8[8192]{0}', space=vmem, size = 0x2000, scoped, tag = 'output window, operand 0, single buffered']
    %7 = vsyncpa [#allocation5], 0
    %8 = vsyncpa [#allocation3], 0
    %9 = vsyncpa [#allocation4], 0
    // Predicated region
    $region2: #{tpu_custom_call.1} parent=1 // pred_check
      _
    $region3: #{tpu_custom_call.1} parent=1 // pred_check_branch
      %11 = sbr.rel (0) target = $region5
    $region4: #{tpu_custom_call.1} parent=1 // pred_region
      %s13 = ssub.s32 16, 16
      %14 = vsyncadd [#allocation5], %s13
      %17 = dma.hbm_to_smem %s0, 16, [#allocation2], [#allocation5]
    $region5: #{tpu_custom_call.1} parent=1 // pred_fallthru
      _
    // Predicated region
    $region6: #{tpu_custom_call.1} parent=1 // pred_check
      _
    $region7: #{tpu_custom_call.1} parent=1 // pred_check_branch
      %19 = sbr.rel (0) target = $region9
    $region8: #{tpu_custom_call.1} parent=1 // pred_region
      %s21 = ssub.s32 256, 256
      %22 = vsyncadd [#allocation3], %s21
      %s24 = sshll.u32 [#allocation6], 4
      %s25 = int_to_ptr.vmem [resolvable:$true] %s24
      %27 = dma.hbm_to_vmem [thread:$0]  %s1, 256, %s25, [#allocation3]
    $region9: #{tpu_custom_call.1} parent=1 // pred_fallthru
      _
    // Predicated region
    $region10: #{tpu_custom_call.1} parent=1 // pred_check
      _
    $region11: #{tpu_custom_call.1} parent=1 // pred_check_branch
      %29 = sbr.rel (0) target = $region13
    $region12: #{tpu_custom_call.1} parent=1 // pred_region
      %30 = dma.done [#allocation5], 16
    $region13: #{tpu_custom_call.1} parent=1 // pred_fallthru
      _
    // Predicated region
    $region14: #{tpu_custom_call.1} parent=1 // pred_check
      _
    $region15: #{tpu_custom_call.1} parent=1 // pred_check_branch
      %32 = sbr.rel (0) target = $region17
    $region16: #{tpu_custom_call.1} parent=1 // pred_region
      %33 = dma.done [#allocation3], 256
    $region17: #{tpu_custom_call.1} parent=1 // pred_fallthru
      _
    %34 = sfence
    %s35 = sld [smem:[#allocation2]]
    %s36 = sld [smem:[#allocation2 + $0x1]]
    %v37 = vld [vmem:[#allocation6] sm:$0xff]
    %v38 = vld [vmem:[#allocation6 + $0x8] sm:$0xff]
    %v39 = vstv %s35
    %v40 = vmul.f32 %v37, %v39
    %v41 = vmul.f32 %v38, %v39
    %v42 = vstv %s36
    %v43 = vadd.f32 %v40, %v42
    %v44 = vadd.f32 %v41, %v42
    %45 = vst [vmem:[#allocation7] sm:$0xff] %v43
    %46 = vst [vmem:[#allocation7 + $0x8] sm:$0xff] %v44
    // Predicated region
    $region18: #{tpu_custom_call.1} parent=1 // pred_check
      _
    $region19: #{tpu_custom_call.1} parent=1 // pred_check_branch
      %48 = sbr.rel (0) target = $region21
    $region20: #{tpu_custom_call.1} parent=1 // pred_region
      %s50 = ssub.s32 256, 256
      %51 = vsyncadd [#allocation4], %s50
      %s53 = sshll.u32 [#allocation7], 4
      %s54 = int_to_ptr.vmem [resolvable:$true] %s53
      %56 = dma.vmem_to_hbm [thread:$0]  %s54, 256, %s2, [#allocation4]
    $region21: #{tpu_custom_call.1} parent=1 // pred_fallthru
      _
    // Predicated region
    $region22: #{tpu_custom_call.1} parent=1 // pred_check
      _
    $region23: #{tpu_custom_call.1} parent=1 // pred_check_branch
      %58 = sbr.rel (0) target = $region25
    $region24: #{tpu_custom_call.1} parent=1 // pred_region
      %59 = dma.done [#allocation4], 256
    $region25: #{tpu_custom_call.1} parent=1 // pred_fallthru
      _
    %60 = vsyncpa [#allocation3], 1
    %61 = vsyncpa [#allocation4], 1
    %62 = vsyncpa [#allocation5], 1

</llo_original>
